<compile_context>
chip_gen: v7x
topology: tpu7x:2x2x1
jax: 0.10.0
libtpu: 0.0.40
codegen_flags: <defaults>
</compile_context>

<pallas_src>
import math

import jax
import jax.numpy as jnp
from jax.experimental import pallas as pl
from jax.experimental.pallas import tpu as pltpu


_VMEM_BUDGET_BYTES = 40 * 1024 * 1024   # conservative block budget (v7x: 64 MiB/TC)
_VMEM_LIMIT_BYTES = 48 * 1024 * 1024    # scoped VMEM requested from the compiler


def _round_up(x, m):
    return ((x + m - 1) // m) * m


def _make_kernel(F, V_pad, D_pad, TN):
    def kernel(x_ref, tab_ref, o_ref):
        # x_ref:   (F, TN)          int32 ids, lane-dense (one contiguous DMA/step)
        # tab_ref: (F, V_pad, D_pad) bf16, resident (constant index_map, 1 buffer)
        # o_ref:   (TN, F * D_pad)  output block
        for f in range(F):  # tiny static unroll over the feature axis
            tok = x_ref[f:f + 1, :]                                    # (1, TN)
            iota_v = jax.lax.broadcasted_iota(jnp.int32, (V_pad, TN), 0)
            # Transposed one-hot chunk, generated & consumed immediately
            # (never materialize the full (TN, F*V_pad) multi-hot).
            onehot_t = (tok == iota_v).astype(tab_ref.dtype)           # (V_pad, TN)
            # one_hot^T @ table_f on the MXU: bf16 inputs, f32 accumulation.
            res = jax.lax.dot_general(
                onehot_t, tab_ref[f],
                dimension_numbers=(((0,), (0,)), ((), ())),
                preferred_element_type=jnp.float32)                    # (TN, D_pad)
            # 128-aligned, unmasked column-slice store into the output block.
            o_ref[:, f * D_pad:(f + 1) * D_pad] = res.astype(o_ref.dtype)
    return kernel


def prepare_multi_embedding_tables(tables_stacked, *, table_dtype=jnp.bfloat16):
    """Pad each per-feature table to lane/MXU-friendly multiples of 128 and
    cast to bf16.  Call ONCE and reuse across forwards (do not rebuild per
    step).  tables_stacked: (F, V_max, D) -> (F, V_pad, D_pad)."""
    F, V, D = tables_stacked.shape
    V_pad = _round_up(max(V, 128), 128)
    D_pad = _round_up(max(D, 128), 128)
    tab = jnp.pad(tables_stacked, ((0, 0), (0, V_pad - V), (0, D_pad - D)))
    return tab.astype(table_dtype)


def _pick_tile_n(N, tile_n, F, V_pad, D_pad, out_bytes):
    if N <= 128:
        return N  # single block, shapes equal the full array dims
    TN = min(int(tile_n), _round_up(N, 128))
    TN = max(128, (TN // 128) * 128)
    # v7x megacore: keep grid_n >= 2 so the "parallel" axis can shard across
    # both TensorCores instead of leaving one idle.
    TN = min(TN, max(128, _round_up(pl.cdiv(N, 2), 128)))

    def est(tn):
        return (8 * tn * 4 * 2                        # id block (>=8 sublanes), 2 bufs
                + F * V_pad * D_pad * 2               # bf16 table, single-buffered
                + tn * F * D_pad * out_bytes * 2      # output block, 2 bufs
                + tn * V_pad * 2 + tn * D_pad * 4)    # live one-hot chunk + f32 result

    while TN > 128 and est(TN) > _VMEM_BUDGET_BYTES:
        TN = max(128, ((TN // 2) // 128) * 128)
    return TN


def multi_embedding_forward(x, prepared_tables, dim_model, *, tile_n=1024,
                            out_dtype=jnp.float32):
    """x: int ids (..., F); prepared_tables: (F, V_pad, D_pad) bf16 from
    prepare_multi_embedding_tables.  Returns (..., F * dim_model).

    out_dtype defaults to float32 to match the PyTorch module; pass
    jnp.bfloat16 to halve HBM writeback (the kernel is writeback-bound at
    production sizes)."""
    F, V_pad, D_pad = prepared_tables.shape
    D = int(dim_model)
    lead = x.shape[:-1]
    assert x.shape[-1] == F
    N = int(math.prod(lead)) if lead else 1

    # Lane-dense id layout: (F, N) so each grid step DMAs one contiguous
    # (F, TN) block instead of a thin strided (TN, F) one.
    x_t = jnp.transpose(x.reshape(N, F).astype(jnp.int32))            # (F, N)

    out_bytes = jnp.dtype(out_dtype).itemsize
    TN = _pick_tile_n(N, tile_n, F, V_pad, D_pad, out_bytes)
    grid_n = pl.cdiv(N, TN)

    # TODO(synk): for vocabularies beyond a few thousand rows the one-hot/MXU
    # formulation stops fitting VMEM; switch to a gather design (tables kept in
    # HBM via memory_space=pl.ANY + scalar-prefetched ids driving per-row DMAs).

    kernel = _make_kernel(F, V_pad, D_pad, TN)
    out = pl.pallas_call(
        kernel,
        out_shape=jax.ShapeDtypeStruct((N, F * D_pad), out_dtype),
        grid_spec=pltpu.PrefetchScalarGridSpec(
            num_scalar_prefetch=0,
            grid=(grid_n,),
            in_specs=[
                pl.BlockSpec((F, TN), lambda i: (0, i)),
                # Whole table, constant index_map -> DMA'd once; Buffered(1)
                # avoids allocating a useless second buffer.
                pl.BlockSpec((F, V_pad, D_pad), lambda i: (0, 0, 0),
                             pipeline_mode=pl.Buffered(1)),
            ],
            out_specs=pl.BlockSpec((TN, F * D_pad), lambda i: (i, 0)),
        ),
        compiler_params=pltpu.CompilerParams(
            dimension_semantics=("parallel",),
            vmem_limit_bytes=_VMEM_LIMIT_BYTES),
    )(x_t, prepared_tables)                                           # (N, F*D_pad)

    if D_pad != D:
        out = out.reshape(N, F, D_pad)[..., :D].reshape(N, F * D)
    return out.reshape(*lead, F * D)


def build_tables(key, vocab_sizes, dim_model):
    """Deterministic kaiming_normal_-style init (fan_in = dim_model) for each
    embedding table; stack into (F, V_max, D) with zero padding (f32)."""
    F = len(vocab_sizes)
    V_max = max(vocab_sizes)
    std = math.sqrt(2.0 / dim_model)
    keys = jax.random.split(key, F)
    tabs = []
    for f, V in enumerate(vocab_sizes):
        w = jax.random.normal(keys[f], (V, dim_model), jnp.float32) * std
        if V < V_max:
            w = jnp.pad(w, ((0, V_max - V), (0, 0)))
        tabs.append(w)
    return jnp.stack(tabs, axis=0)  # (F, V_max, D)


if __name__ == "__main__":
    # Small synthetic "vocab": 3 compound-token features, dim_model = 32.
    feature_list = ["type", "pitch", "duration"]
    vocab_sizes = [16, 24, 20]
    dim_model = 32
    F = len(feature_list)

    key = jax.random.PRNGKey(0)
    k_tab, k_tok1, k_tok2 = jax.random.split(key, 3)
    tables = build_tables(k_tab, vocab_sizes, dim_model)          # (F, V_max, D) f32
    prepared = prepare_multi_embedding_tables(tables)             # (F, 128, 128) bf16, built ONCE

    # bf16-rounded reference tables (the one-hot dot selects exact bf16 rows).
    tables_bf16 = tables.astype(jnp.bfloat16).astype(jnp.float32)

    # --- Test 1: (B, S, F) batch, single grid step, f32 output --------------
    B, S = 2, 8
    tok_keys = jax.random.split(k_tok1, F)
    x = jnp.stack(
        [jax.random.randint(tok_keys[f], (B, S), 0, vocab_sizes[f], jnp.int32)
         for f in range(F)], axis=-1)                             # (B, S, F)
    out = jax.block_until_ready(multi_embedding_forward(x, prepared, dim_model))
    assert out.shape == (B, S, F * dim_model)
    ref = jnp.concatenate([tables_bf16[f][x[..., f]] for f in range(F)], axis=-1)
    assert jnp.allclose(out, ref, atol=1e-6), "test 1: mismatch vs bf16 reference"
    ref_f32 = jnp.concatenate([tables[f][x[..., f]] for f in range(F)], axis=-1)
    assert jnp.allclose(out, ref_f32, atol=2e-2), "test 1: drifted from f32 reference"

    # --- Test 2: ragged grid (N % TN != 0) + bf16 output fast path ----------
    N2 = 300                                  # TN=128 -> 3 tiles, last one ragged
    tok_keys2 = jax.random.split(k_tok2, F)
    x2 = jnp.stack(
        [jax.random.randint(tok_keys2[f], (N2,), 0, vocab_sizes[f], jnp.int32)
         for f in range(F)], axis=-1)                             # (N2, F)
    out2 = jax.block_until_ready(
        multi_embedding_forward(x2, prepared, dim_model,
                                tile_n=128, out_dtype=jnp.bfloat16))
    assert out2.shape == (N2, F * dim_model)
    ref2 = jnp.concatenate([tables_bf16[f][x2[..., f]] for f in range(F)], axis=-1)
    assert jnp.allclose(out2.astype(jnp.float32), ref2, atol=1e-2), \
        "test 2: ragged-tile mismatch vs reference"

    print("KERNEL_OK")
</pallas_src>

<mosaic_0001>
module attributes {stable_mosaic.version = 11 : i64} {
  func.func @kernel(%arg0: i32, %arg1: memref<3x16xi32, #tpu.memory_space<vmem>>, %arg2: memref<3x128x128xbf16, #tpu.memory_space<vmem>>, %arg3: memref<16x384xf32, #tpu.memory_space<vmem>>) attributes {dimension_semantics = [#tpu.dimension_semantics<parallel>], iteration_bounds = array<i64: 1>, scalar_prefetch = 0 : i64, scratch_operands = 0 : i64, tpu.core_type = #tpu.core_type<tc>, window_params = [{transform_indices = @transform_0, window_bounds = array<i64: 3, 16>}, {pipeline_mode = #tpu.pipeline_mode<synchronous>, transform_indices = @transform_1, window_bounds = array<i64: 3, 128, 128>}, {transform_indices = @transform_2, window_bounds = array<i64: 16, 384>}]} {
    %c0 = arith.constant 0 : index
    %c0_0 = arith.constant 0 : index
    %0 = vector.load %arg1[%c0, %c0_0] : memref<3x16xi32, #tpu.memory_space<vmem>>, vector<1x16xi32>
    %1 = tpu.iota {dimensions = array<i32: 0>} : vector<128x16xi32>
    %2 = vector.broadcast %0 : vector<1x16xi32> to vector<128x16xi32>
    %3 = arith.cmpi eq, %2, %1 : vector<128x16xi32>
    %4 = arith.extui %3 : vector<128x16xi1> to vector<128x16xi32>
    %5 = arith.sitofp %4 : vector<128x16xi32> to vector<128x16xf32>
    %6 = arith.truncf %5 : vector<128x16xf32> to vector<128x16xbf16>
    %c0_1 = arith.constant 0 : index
    %c0_2 = arith.constant 0 : index
    %c0_3 = arith.constant 0 : index
    %7 = vector.load %arg2[%c0_1, %c0_2, %c0_3] : memref<3x128x128xbf16, #tpu.memory_space<vmem>>, vector<1x128x128xbf16>
    %8 = vector.shape_cast %7 : vector<1x128x128xbf16> to vector<128x128xbf16>
    %cst = arith.constant dense<0.000000e+00> : vector<16x128xf32>
    %9 = tpu.matmul %6, %8, %cst {dimension_numbers = #tpu.dot_dimension_numbers<[0], [0], [1], [1], [0, 1, 1, 1], [], []>} : vector<128x16xbf16>, vector<128x128xbf16>, vector<16x128xf32> -> vector<16x128xf32>
    %c0_4 = arith.constant 0 : index
    %c0_5 = arith.constant 0 : index
    %10 = vector.load %arg3[%c0_4, %c0_5] : memref<16x384xf32, #tpu.memory_space<vmem>>, vector<16x128xf32>
    tpu.vector_store %arg3[%c0_4, %c0_5], %9 {strides = array<i32>} : memref<16x384xf32, #tpu.memory_space<vmem>>, vector<16x128xf32>,
    %c1 = arith.constant 1 : index
    %c0_6 = arith.constant 0 : index
    %11 = vector.load %arg1[%c1, %c0_6] : memref<3x16xi32, #tpu.memory_space<vmem>>, vector<1x16xi32>
    %12 = tpu.iota {dimensions = array<i32: 0>} : vector<128x16xi32>
    %13 = vector.broadcast %11 : vector<1x16xi32> to vector<128x16xi32>
    %14 = arith.cmpi eq, %13, %12 : vector<128x16xi32>
    %15 = arith.extui %14 : vector<128x16xi1> to vector<128x16xi32>
    %16 = arith.sitofp %15 : vector<128x16xi32> to vector<128x16xf32>
    %17 = arith.truncf %16 : vector<128x16xf32> to vector<128x16xbf16>
    %c1_7 = arith.constant 1 : index
    %c0_8 = arith.constant 0 : index
    %c0_9 = arith.constant 0 : index
    %18 = vector.load %arg2[%c1_7, %c0_8, %c0_9] : memref<3x128x128xbf16, #tpu.memory_space<vmem>>, vector<1x128x128xbf16>
    %19 = vector.shape_cast %18 : vector<1x128x128xbf16> to vector<128x128xbf16>
    %cst_10 = arith.constant dense<0.000000e+00> : vector<16x128xf32>
    %20 = tpu.matmul %17, %19, %cst_10 {dimension_numbers = #tpu.dot_dimension_numbers<[0], [0], [1], [1], [0, 1, 1, 1], [], []>} : vector<128x16xbf16>, vector<128x128xbf16>, vector<16x128xf32> -> vector<16x128xf32>
    %c0_11 = arith.constant 0 : index
    %c128 = arith.constant 128 : index
    %21 = vector.load %arg3[%c0_11, %c128] : memref<16x384xf32, #tpu.memory_space<vmem>>, vector<16x128xf32>
    tpu.vector_store %arg3[%c0_11, %c128], %20 {strides = array<i32>} : memref<16x384xf32, #tpu.memory_space<vmem>>, vector<16x128xf32>,
    %c2 = arith.constant 2 : index
    %c0_12 = arith.constant 0 : index
    %22 = vector.load %arg1[%c2, %c0_12] : memref<3x16xi32, #tpu.memory_space<vmem>>, vector<1x16xi32>
    %23 = tpu.iota {dimensions = array<i32: 0>} : vector<128x16xi32>
    %24 = vector.broadcast %22 : vector<1x16xi32> to vector<128x16xi32>
    %25 = arith.cmpi eq, %24, %23 : vector<128x16xi32>
    %26 = arith.extui %25 : vector<128x16xi1> to vector<128x16xi32>
    %27 = arith.sitofp %26 : vector<128x16xi32> to vector<128x16xf32>
    %28 = arith.truncf %27 : vector<128x16xf32> to vector<128x16xbf16>
    %c2_13 = arith.constant 2 : index
    %c0_14 = arith.constant 0 : index
    %c0_15 = arith.constant 0 : index
    %29 = vector.load %arg2[%c2_13, %c0_14, %c0_15] : memref<3x128x128xbf16, #tpu.memory_space<vmem>>, vector<1x128x128xbf16>
    %30 = vector.shape_cast %29 : vector<1x128x128xbf16> to vector<128x128xbf16>
    %cst_16 = arith.constant dense<0.000000e+00> : vector<16x128xf32>
    %31 = tpu.matmul %28, %30, %cst_16 {dimension_numbers = #tpu.dot_dimension_numbers<[0], [0], [1], [1], [0, 1, 1, 1], [], []>} : vector<128x16xbf16>, vector<128x128xbf16>, vector<16x128xf32> -> vector<16x128xf32>
    %c0_17 = arith.constant 0 : index
    %c256 = arith.constant 256 : index
    %32 = vector.load %arg3[%c0_17, %c256] : memref<16x384xf32, #tpu.memory_space<vmem>>, vector<16x128xf32>
    tpu.vector_store %arg3[%c0_17, %c256], %31 {strides = array<i32>} : memref<16x384xf32, #tpu.memory_space<vmem>>, vector<16x128xf32>,
    return
  }
  func.func @transform_0(%arg0: i32) -> (i32, i32) {
    %c0_i32 = arith.constant 0 : i32
    %c0_i32_0 = arith.constant 0 : i32
    return %c0_i32, %arg0 : i32, i32
  }
  func.func @transform_1(%arg0: i32) -> (i32, i32, i32) {
    %c0_i32 = arith.constant 0 : i32
    %c0_i32_0 = arith.constant 0 : i32
    %c0_i32_1 = arith.constant 0 : i32
    %c0_i32_2 = arith.constant 0 : i32
    return %c0_i32, %c0_i32_0, %c0_i32_1 : i32, i32, i32
  }
  func.func @transform_2(%arg0: i32) -> (i32, i32) {
    %c0_i32 = arith.constant 0 : i32
    %c0_i32_0 = arith.constant 0 : i32
    return %arg0, %c0_i32 : i32, i32
  }
}

</mosaic_0001>

<llo_original>
// kernel: tpu_custom_call.1
$region0: #{tpu_custom_call.1}
  #allocation0 [shape = 'u32[]', space=smem, size = 0x4, offset = 0x4, fixed_abs, tag = 'smem constant byte address 0x4 - core index']
  #allocation1 [shape = 'u32[144,128]{1,0:T(1,128)}', space=vmem, size = 0x12000, scoped, tag = 'internal scratch']
  %s0 = inlined_call_operand.hbm [shape: s32[3,16], index: 0, kind: input, shape index: {}]
  %s1 = inlined_call_operand.hbm [shape: bf16[3,128,128], index: 1, kind: input, shape index: {}]
  %s2 = inlined_call_operand.hbm [shape: f32[16,384], index: 2, kind: output, shape index: {}]
  %s3 = sld [smem:[#allocation0]]
  $region26: #{tpu_custom_call.1} parent=0
    _
  %s5 = ssub.s32 1, %s3
  %s6 = scalar_select 0, %s5, %s3
  $region1: #{tpu_custom_call.1} parent=0
    #allocation2 [shape = 'u8[2048]{0}', space=vmem, size = 0x800, scoped, tag = 'input window, operand 0, single buffered']
    #allocation3 [shape = 's32[1]{0}', space=sflag, size = 0x4, scoped, tag = 'scoped memory for tpu_custom_call.1']
    #allocation4 [shape = 's32[1]{0}', space=sflag, size = 0x4, scoped, tag = 'scoped memory for tpu_custom_call.1']
    #allocation5 [shape = 'u8[98304]{0}', space=vmem, size = 0x18000, scoped, tag = 'input window, operand 1, single buffered']
    #allocation6 [shape = 's32[1]{0}', space=sflag, size = 0x4, scoped, tag = 'scoped memory for tpu_custom_call.1']
    #allocation7 [shape = 'u8[24576]{0}', space=vmem, size = 0x6000, scoped, tag = 'output window, operand 0, single buffered']
    %7 = vsyncpa [#allocation3], 0
    %8 = vsyncpa [#allocation6], 0
    %9 = vsyncpa [#allocation4], 0
    // Predicated region
    $region2: #{tpu_custom_call.1} parent=1 // pred_check
      _
    $region3: #{tpu_custom_call.1} parent=1 // pred_check_branch
      %11 = sbr.rel (0) target = $region5
    $region4: #{tpu_custom_call.1} parent=1 // pred_region
      %s13 = ssub.s32 64, 64
      %14 = vsyncadd [#allocation3], %s13
      %s16 = sshll.u32 [#allocation2], 4
      %s17 = int_to_ptr.vmem [resolvable:$true] %s16
      %19 = dma.hbm_to_vmem [thread:$0]  %s0, 64, %s17, [#allocation3]
    $region5: #{tpu_custom_call.1} parent=1 // pred_fallthru
      _
    // Predicated region
    $region6: #{tpu_custom_call.1} parent=1 // pred_check
      _
    $region7: #{tpu_custom_call.1} parent=1 // pred_check_branch
      %21 = sbr.rel (0) target = $region9
    $region8: #{tpu_custom_call.1} parent=1 // pred_region
      %s23 = ssub.s32 3072, 3072
      %24 = vsyncadd [#allocation6], %s23
      %s25 = sshll.u32 [#allocation5], 4
      %s26 = int_to_ptr.vmem [resolvable:$true] %s25
      %31 = dma.hbm_to_vmem [thread:$0]  %s1, 3072, %s26, [#allocation6], 64, 64, 4
    $region9: #{tpu_custom_call.1} parent=1 // pred_fallthru
      _
    // Predicated region
    $region10: #{tpu_custom_call.1} parent=1 // pred_check
      _
    $region11: #{tpu_custom_call.1} parent=1 // pred_check_branch
      %33 = sbr.rel (0) target = $region13
    $region12: #{tpu_custom_call.1} parent=1 // pred_region
      %34 = dma.done [#allocation3], 64
    $region13: #{tpu_custom_call.1} parent=1 // pred_fallthru
      _
    // Predicated region
    $region14: #{tpu_custom_call.1} parent=1 // pred_check
      _
    $region15: #{tpu_custom_call.1} parent=1 // pred_check_branch
      %36 = sbr.rel (0) target = $region17
    $region16: #{tpu_custom_call.1} parent=1 // pred_region
      %37 = dma.done [#allocation6], 3072
    $region17: #{tpu_custom_call.1} parent=1 // pred_fallthru
      _
    %v39 = vld [vmem:[#allocation2] sm:$0x1]
    %v40 = vlaneseq
    %v41 = vshrl.u32 %v40, 7
    %v42 = vadd.s32 %v41, 8
    %v43 = vadd.s32 %v41, 16
    %v44 = vadd.s32 %v41, 24
    %v45 = vadd.s32 %v41, 32
    %v46 = vadd.s32 %v41, 40
    %v47 = vadd.s32 %v41, 48
    %v48 = vadd.s32 %v41, 56
    %v49 = vadd.s32 %v41, 64
    %v50 = vadd.s32 %v41, 72
    %v51 = vadd.s32 %v41, 80
    %v52 = vadd.s32 %v41, 88
    %v53 = vadd.s32 %v41, 96
    %v54 = vadd.s32 %v41, 104
    %v55 = vadd.s32 %v41, 112
    %v56 = vadd.s32 %v41, 120
    %v57 = vlaneseq
    %v58 = vshrl.u32 %v57, 7
    %v59 = vsub.s32 0, %v58
    %v60 = vrot.slane %v39, %v59
    %vm61 = vcmp.eq.s32.totalorder %v60, %v41
    %vm62 = vcmp.eq.s32.totalorder %v60, %v42
    %vm63 = vcmp.eq.s32.totalorder %v60, %v43
    %vm64 = vcmp.eq.s32.totalorder %v60, %v44
    %vm65 = vcmp.eq.s32.totalorder %v60, %v45
    %vm66 = vcmp.eq.s32.totalorder %v60, %v46
    %vm67 = vcmp.eq.s32.totalorder %v60, %v47
    %vm68 = vcmp.eq.s32.totalorder %v60, %v48
    %vm69 = vcmp.eq.s32.totalorder %v60, %v49
    %vm70 = vcmp.eq.s32.totalorder %v60, %v50
    %vm71 = vcmp.eq.s32.totalorder %v60, %v51
    %vm72 = vcmp.eq.s32.totalorder %v60, %v52
    %vm73 = vcmp.eq.s32.totalorder %v60, %v53
    %vm74 = vcmp.eq.s32.totalorder %v60, %v54
    %vm75 = vcmp.eq.s32.totalorder %v60, %v55
    %vm76 = vcmp.eq.s32.totalorder %v60, %v56
    %v77 = vsel %vm61, 1, 0
    %v78 = vsel %vm62, 1, 0
    %v79 = vsel %vm63, 1, 0
    %v80 = vsel %vm64, 1, 0
    %v81 = vsel %vm65, 1, 0
    %v82 = vsel %vm66, 1, 0
    %v83 = vsel %vm67, 1, 0
    %v84 = vsel %vm68, 1, 0
    %v85 = vsel %vm69, 1, 0
    %v86 = vsel %vm70, 1, 0
    %v87 = vsel %vm71, 1, 0
    %v88 = vsel %vm72, 1, 0
    %v89 = vsel %vm73, 1, 0
    %v90 = vsel %vm74, 1, 0
    %v91 = vsel %vm75, 1, 0
    %v92 = vsel %vm76, 1, 0
    %v93 = vcvt.s32.f32 %v77
    %v94 = vcvt.s32.f32 %v78
    %v95 = vcvt.s32.f32 %v79
    %v96 = vcvt.s32.f32 %v80
    %v97 = vcvt.s32.f32 %v81
    %v98 = vcvt.s32.f32 %v82
    %v99 = vcvt.s32.f32 %v83
    %v100 = vcvt.s32.f32 %v84
    %v101 = vcvt.s32.f32 %v85
    %v102 = vcvt.s32.f32 %v86
    %v103 = vcvt.s32.f32 %v87
    %v104 = vcvt.s32.f32 %v88
    %v105 = vcvt.s32.f32 %v89
    %v106 = vcvt.s32.f32 %v90
    %v107 = vcvt.s32.f32 %v91
    %v108 = vcvt.s32.f32 %v92
    %v109 = vpack.c.bf16 %v94, %v93
    %v110 = vpack.c.bf16 %v96, %v95
    %v111 = vpack.c.bf16 %v98, %v97
    %v112 = vpack.c.bf16 %v100, %v99
    %v113 = vpack.c.bf16 %v102, %v101
    %v114 = vpack.c.bf16 %v104, %v103
    %v115 = vpack.c.bf16 %v106, %v105
    %v116 = vpack.c.bf16 %v108, %v107
    %v117 = vld [vmem:[#allocation5] sm:$0xf]
    %v118 = vld [vmem:[#allocation5 + $0x4] sm:$0xf]
    %v119 = vld [vmem:[#allocation5 + $0x8] sm:$0xf]
    %v120 = vld [vmem:[#allocation5 + $0xc] sm:$0xf]
    %v121 = vld [vmem:[#allocation5 + $0x10] sm:$0xf]
    %v122 = vld [vmem:[#allocation5 + $0x14] sm:$0xf]
    %v123 = vld [vmem:[#allocation5 + $0x18] sm:$0xf]
    %v124 = vld [vmem:[#allocation5 + $0x1c] sm:$0xf]
    %v125 = vld [vmem:[#allocation5 + $0x20] sm:$0xf]
    %v126 = vld [vmem:[#allocation5 + $0x24] sm:$0xf]
    %v127 = vld [vmem:[#allocation5 + $0x28] sm:$0xf]
    %v128 = vld [vmem:[#allocation5 + $0x2c] sm:$0xf]
    %v129 = vld [vmem:[#allocation5 + $0x30] sm:$0xf]
    %v130 = vld [vmem:[#allocation5 + $0x34] sm:$0xf]
    %v131 = vld [vmem:[#allocation5 + $0x38] sm:$0xf]
    %v132 = vld [vmem:[#allocation5 + $0x3c] sm:$0xf]
    %133 = vxpose.xlu0.c.b16.start [1/8] %v109, 128
    %134 = vxpose.xlu0.c.b16.cont [2/8] %v110, 128
    %135 = vxpose.xlu0.c.b16.cont [3/8] %v111, 128
    %136 = vxpose.xlu0.c.b16.cont [4/8] %v112, 128
    %137 = vxpose.xlu0.c.b16.cont [5/8] %v113, 128
    %138 = vxpose.xlu0.c.b16.cont [6/8] %v114, 128
    %139 = vxpose.xlu0.c.b16.cont [7/8] %v115, 128
    %140 = vxpose.xlu0.c.b16.end [8/8] %v116, 128
    %v141 = vpop.trf.xlu0
    %v142 = vpop.trf.xlu0
    %v143 = vpop.trf.xlu0
    %v144 = vpop.trf.xlu0
    %v145 = vpop.trf.xlu0
    %v146 = vpop.trf.xlu0
    %v147 = vpop.trf.xlu0
    %v148 = vpop.trf.xlu0
    %v165 = vunpack.c.l.b16 %v117
    %v166 = vunpack.c.l.b16 %v118
    %v167 = vunpack.c.l.b16 %v119
    %v168 = vunpack.c.l.b16 %v120
    %v169 = vunpack.c.l.b16 %v121
    %v170 = vunpack.c.l.b16 %v122
    %v171 = vunpack.c.l.b16 %v123
    %v172 = vunpack.c.l.b16 %v124
    %v173 = vunpack.c.l.b16 %v125
    %v174 = vunpack.c.l.b16 %v126
    %v175 = vunpack.c.l.b16 %v127
    %v176 = vunpack.c.l.b16 %v128
    %v177 = vunpack.c.l.b16 %v129
    %v178 = vunpack.c.l.b16 %v130
    %v179 = vunpack.c.l.b16 %v131
    %v180 = vunpack.c.l.b16 %v132
    %v181 = vpack.c.b16 %v166, %v165
    %v182 = vpack.c.b16 %v168, %v167
    %v183 = vpack.c.b16 %v170, %v169
    %v184 = vpack.c.b16 %v172, %v171
    %v185 = vpack.c.b16 %v174, %v173
    %v186 = vpack.c.b16 %v176, %v175
    %v187 = vpack.c.b16 %v178, %v177
    %v188 = vpack.c.b16 %v180, %v179
    %197 = vmatprep.subr.bf16.mxu0 0
    %198 = vmatpush1.bf16.msra.mxu0 %v181
    %199 = vmatprep.subr.bf16.mxu0 0
    %200 = vmatpush1.bf16.msra.mxu0 %v182
    %201 = vmatprep.subr.bf16.mxu0 0
    %202 = vmatpush1.bf16.msra.mxu0 %v183
    %203 = vmatprep.subr.bf16.mxu0 0
    %204 = vmatpush1.bf16.msra.mxu0 %v184
    %205 = vmatprep.subr.bf16.mxu0 0
    %206 = vmatpush1.bf16.msra.mxu0 %v185
    %207 = vmatprep.subr.bf16.mxu0 0
    %208 = vmatpush1.bf16.msra.mxu0 %v186
    %209 = vmatprep.subr.bf16.mxu0 0
    %210 = vmatpush1.bf16.msra.mxu0 %v187
    %211 = vmatprep.subr.bf16.mxu0 0
    %212 = vmatpush1.bf16.msra.mxu0 %v188
    %213 = vmatprep.subr.bf16.mxu0 0
    %214 = vmatpush1.bf16.msra.mxu0 0
    %215 = vmatprep.subr.bf16.mxu0 0
    %216 = vmatpush1.bf16.msra.mxu0 0
    %217 = vmatprep.subr.bf16.mxu0 0
    %218 = vmatpush1.bf16.msra.mxu0 0
    %219 = vmatprep.subr.bf16.mxu0 0
    %220 = vmatpush1.bf16.msra.mxu0 0
    %221 = vmatprep.subr.bf16.mxu0 0
    %222 = vmatpush1.bf16.msra.mxu0 0
    %223 = vmatprep.subr.bf16.mxu0 0
    %224 = vmatpush1.bf16.msra.mxu0 0
    %225 = vmatprep.subr.bf16.mxu0 0
    %226 = vmatpush1.bf16.msra.mxu0 0
    %227 = vmatprep.subr.bf16.mxu0 0
    %228 = vmatpush1.bf16.msra.mxu0 0
    %229 = vmatprep.mubr.bf16.mxu0 0
    %230 = vmatmul.mubr.bf16.gmra.mrb[0].mxu0 %v141
    %v231 = vpop.f32.mrb[0].mxu0
    %v232 = vadd.f32 0.0, %v231
    %v233 = vpop.f32.mrb[0].mxu0
    %v234 = vpop.f32.mrb[0].mxu0
    %v235 = vadd.f32 0.0, %v234
    %v236 = vpop.f32.mrb[0].mxu0
    %237 = vdwg.mxu0
    %238 = vst [vmem:[#allocation7] sm:$0xff] %v232
    %239 = vst [vmem:[#allocation7 + $0x18] sm:$0xff] %v235
    %v240 = vld [vmem:[#allocation2 + $0x1] sm:$0x1]
    %v241 = vlaneseq
    %v242 = vshrl.u32 %v241, 7
    %v243 = vsub.s32 0, %v242
    %v244 = vrot.slane %v240, %v243
    %vm245 = vcmp.eq.s32.totalorder %v244, %v41
    %vm246 = vcmp.eq.s32.totalorder %v244, %v42
    %vm247 = vcmp.eq.s32.totalorder %v244, %v43
    %vm248 = vcmp.eq.s32.totalorder %v244, %v44
    %vm249 = vcmp.eq.s32.totalorder %v244, %v45
    %vm250 = vcmp.eq.s32.totalorder %v244, %v46
    %vm251 = vcmp.eq.s32.totalorder %v244, %v47
    %vm252 = vcmp.eq.s32.totalorder %v244, %v48
    %vm253 = vcmp.eq.s32.totalorder %v244, %v49
    %vm254 = vcmp.eq.s32.totalorder %v244, %v50
    %vm255 = vcmp.eq.s32.totalorder %v244, %v51
    %vm256 = vcmp.eq.s32.totalorder %v244, %v52
    %vm257 = vcmp.eq.s32.totalorder %v244, %v53
    %vm258 = vcmp.eq.s32.totalorder %v244, %v54
    %vm259 = vcmp.eq.s32.totalorder %v244, %v55
    %vm260 = vcmp.eq.s32.totalorder %v244, %v56
    %v261 = vsel %vm245, 1, 0
    %v262 = vsel %vm246, 1, 0
    %v263 = vsel %vm247, 1, 0
    %v264 = vsel %vm248, 1, 0
    %v265 = vsel %vm249, 1, 0
    %v266 = vsel %vm250, 1, 0
    %v267 = vsel %vm251, 1, 0
    %v268 = vsel %vm252, 1, 0
    %v269 = vsel %vm253, 1, 0
    %v270 = vsel %vm254, 1, 0
    %v271 = vsel %vm255, 1, 0
    %v272 = vsel %vm256, 1, 0
    %v273 = vsel %vm257, 1, 0
    %v274 = vsel %vm258, 1, 0
    %v275 = vsel %vm259, 1, 0
    %v276 = vsel %vm260, 1, 0
    %v277 = vcvt.s32.f32 %v261
    %v278 = vcvt.s32.f32 %v262
    %v279 = vcvt.s32.f32 %v263
    %v280 = vcvt.s32.f32 %v264
    %v281 = vcvt.s32.f32 %v265
    %v282 = vcvt.s32.f32 %v266
    %v283 = vcvt.s32.f32 %v267
    %v284 = vcvt.s32.f32 %v268
    %v285 = vcvt.s32.f32 %v269
    %v286 = vcvt.s32.f32 %v270
    %v287 = vcvt.s32.f32 %v271
    %v288 = vcvt.s32.f32 %v272
    %v289 = vcvt.s32.f32 %v273
    %v290 = vcvt.s32.f32 %v274
    %v291 = vcvt.s32.f32 %v275
    %v292 = vcvt.s32.f32 %v276
    %v293 = vpack.c.bf16 %v278, %v277
    %v294 = vpack.c.bf16 %v280, %v279
    %v295 = vpack.c.bf16 %v282, %v281
    %v296 = vpack.c.bf16 %v284, %v283
    %v297 = vpack.c.bf16 %v286, %v285
    %v298 = vpack.c.bf16 %v288, %v287
    %v299 = vpack.c.bf16 %v290, %v289
    %v300 = vpack.c.bf16 %v292, %v291
    %s301 = scalar_lea.vmem [#allocation5], 64
    %v302 = vld [vmem:[%s301] sm:$0xf]
    %v303 = vld [vmem:[%s301 + $0x4] sm:$0xf]
    %v304 = vld [vmem:[%s301 + $0x8] sm:$0xf]
    %v305 = vld [vmem:[%s301 + $0xc] sm:$0xf]
    %v306 = vld [vmem:[%s301 + $0x10] sm:$0xf]
    %v307 = vld [vmem:[%s301 + $0x14] sm:$0xf]
    %v308 = vld [vmem:[%s301 + $0x18] sm:$0xf]
    %v309 = vld [vmem:[%s301 + $0x1c] sm:$0xf]
    %v310 = vld [vmem:[%s301 + $0x20] sm:$0xf]
    %v311 = vld [vmem:[%s301 + $0x24] sm:$0xf]
    %v312 = vld [vmem:[%s301 + $0x28] sm:$0xf]
    %v313 = vld [vmem:[%s301 + $0x2c] sm:$0xf]
    %v314 = vld [vmem:[%s301 + $0x30] sm:$0xf]
    %v315 = vld [vmem:[%s301 + $0x34] sm:$0xf]
    %v316 = vld [vmem:[%s301 + $0x38] sm:$0xf]
    %v317 = vld [vmem:[%s301 + $0x3c] sm:$0xf]
    %318 = vxpose.xlu0.c.b16.start [1/8] %v293, 128
    %319 = vxpose.xlu0.c.b16.cont [2/8] %v294, 128
    %320 = vxpose.xlu0.c.b16.cont [3/8] %v295, 128
    %321 = vxpose.xlu0.c.b16.cont [4/8] %v296, 128
    %322 = vxpose.xlu0.c.b16.cont [5/8] %v297, 128
    %323 = vxpose.xlu0.c.b16.cont [6/8] %v298, 128
    %324 = vxpose.xlu0.c.b16.cont [7/8] %v299, 128
    %325 = vxpose.xlu0.c.b16.end [8/8] %v300, 128
    %v326 = vpop.trf.xlu0
    %v327 = vpop.trf.xlu0
    %v328 = vpop.trf.xlu0
    %v329 = vpop.trf.xlu0
    %v330 = vpop.trf.xlu0
    %v331 = vpop.trf.xlu0
    %v332 = vpop.trf.xlu0
    %v333 = vpop.trf.xlu0
    %v350 = vunpack.c.l.b16 %v302
    %v351 = vunpack.c.l.b16 %v303
    %v352 = vunpack.c.l.b16 %v304
    %v353 = vunpack.c.l.b16 %v305
    %v354 = vunpack.c.l.b16 %v306
    %v355 = vunpack.c.l.b16 %v307
    %v356 = vunpack.c.l.b16 %v308
    %v357 = vunpack.c.l.b16 %v309
    %v358 = vunpack.c.l.b16 %v310
    %v359 = vunpack.c.l.b16 %v311
    %v360 = vunpack.c.l.b16 %v312
    %v361 = vunpack.c.l.b16 %v313
    %v362 = vunpack.c.l.b16 %v314
    %v363 = vunpack.c.l.b16 %v315
    %v364 = vunpack.c.l.b16 %v316
    %v365 = vunpack.c.l.b16 %v317
    %v366 = vpack.c.b16 %v351, %v350
    %v367 = vpack.c.b16 %v353, %v352
    %v368 = vpack.c.b16 %v355, %v354
    %v369 = vpack.c.b16 %v357, %v356
    %v370 = vpack.c.b16 %v359, %v358
    %v371 = vpack.c.b16 %v361, %v360
    %v372 = vpack.c.b16 %v363, %v362
    %v373 = vpack.c.b16 %v365, %v364
    %382 = vmatprep.subr.bf16.mxu0 0
    %383 = vmatpush1.bf16.msra.mxu0 %v366
    %384 = vmatprep.subr.bf16.mxu0 0
    %385 = vmatpush1.bf16.msra.mxu0 %v367
    %386 = vmatprep.subr.bf16.mxu0 0
    %387 = vmatpush1.bf16.msra.mxu0 %v368
    %388 = vmatprep.subr.bf16.mxu0 0
    %389 = vmatpush1.bf16.msra.mxu0 %v369
    %390 = vmatprep.subr.bf16.mxu0 0
    %391 = vmatpush1.bf16.msra.mxu0 %v370
    %392 = vmatprep.subr.bf16.mxu0 0
    %393 = vmatpush1.bf16.msra.mxu0 %v371
    %394 = vmatprep.subr.bf16.mxu0 0
    %395 = vmatpush1.bf16.msra.mxu0 %v372
    %396 = vmatprep.subr.bf16.mxu0 0
    %397 = vmatpush1.bf16.msra.mxu0 %v373
    %398 = vmatprep.subr.bf16.mxu0 0
    %399 = vmatpush1.bf16.msra.mxu0 0
    %400 = vmatprep.subr.bf16.mxu0 0
    %401 = vmatpush1.bf16.msra.mxu0 0
    %402 = vmatprep.subr.bf16.mxu0 0
    %403 = vmatpush1.bf16.msra.mxu0 0
    %404 = vmatprep.subr.bf16.mxu0 0
    %405 = vmatpush1.bf16.msra.mxu0 0
    %406 = vmatprep.subr.bf16.mxu0 0
    %407 = vmatpush1.bf16.msra.mxu0 0
    %408 = vmatprep.subr.bf16.mxu0 0
    %409 = vmatpush1.bf16.msra.mxu0 0
    %410 = vmatprep.subr.bf16.mxu0 0
    %411 = vmatpush1.bf16.msra.mxu0 0
    %412 = vmatprep.subr.bf16.mxu0 0
    %413 = vmatpush1.bf16.msra.mxu0 0
    %414 = vmatprep.mubr.bf16.mxu0 0
    %415 = vmatmul.mubr.bf16.gmra.mrb[0].mxu0 %v326
    %v416 = vpop.f32.mrb[0].mxu0
    %v417 = vadd.f32 0.0, %v416
    %v418 = vpop.f32.mrb[0].mxu0
    %v419 = vpop.f32.mrb[0].mxu0
    %v420 = vadd.f32 0.0, %v419
    %v421 = vpop.f32.mrb[0].mxu0
    %422 = vdwg.mxu0
    %423 = vst [vmem:[#allocation7 + $0x8] sm:$0xff] %v417
    %424 = vst [vmem:[#allocation7 + $0x20] sm:$0xff] %v420
    %v425 = vld [vmem:[#allocation2 + $0x2] sm:$0x1]
    %v426 = vlaneseq
    %v427 = vshrl.u32 %v426, 7
    %v428 = vsub.s32 0, %v427
    %v429 = vrot.slane %v425, %v428
    %vm430 = vcmp.eq.s32.totalorder %v429, %v41
    %vm431 = vcmp.eq.s32.totalorder %v429, %v42
    %vm432 = vcmp.eq.s32.totalorder %v429, %v43
    %vm433 = vcmp.eq.s32.totalorder %v429, %v44
    %vm434 = vcmp.eq.s32.totalorder %v429, %v45
    %vm435 = vcmp.eq.s32.totalorder %v429, %v46
    %vm436 = vcmp.eq.s32.totalorder %v429, %v47
    %vm437 = vcmp.eq.s32.totalorder %v429, %v48
    %vm438 = vcmp.eq.s32.totalorder %v429, %v49
    %vm439 = vcmp.eq.s32.totalorder %v429, %v50
    %vm440 = vcmp.eq.s32.totalorder %v429, %v51
    %vm441 = vcmp.eq.s32.totalorder %v429, %v52
    %vm442 = vcmp.eq.s32.totalorder %v429, %v53
    %vm443 = vcmp.eq.s32.totalorder %v429, %v54
    %vm444 = vcmp.eq.s32.totalorder %v429, %v55
    %vm445 = vcmp.eq.s32.totalorder %v429, %v56
    %v446 = vsel %vm430, 1, 0
    %v447 = vsel %vm431, 1, 0
    %v448 = vsel %vm432, 1, 0
    %v449 = vsel %vm433, 1, 0
    %v450 = vsel %vm434, 1, 0
    %v451 = vsel %vm435, 1, 0
    %v452 = vsel %vm436, 1, 0
    %v453 = vsel %vm437, 1, 0
    %v454 = vsel %vm438, 1, 0
    %v455 = vsel %vm439, 1, 0
    %v456 = vsel %vm440, 1, 0
    %v457 = vsel %vm441, 1, 0
    %v458 = vsel %vm442, 1, 0
    %v459 = vsel %vm443, 1, 0
    %v460 = vsel %vm444, 1, 0
    %v461 = vsel %vm445, 1, 0
    %v462 = vcvt.s32.f32 %v446
    %v463 = vcvt.s32.f32 %v447
    %v464 = vcvt.s32.f32 %v448
    %v465 = vcvt.s32.f32 %v449
    %v466 = vcvt.s32.f32 %v450
    %v467 = vcvt.s32.f32 %v451
    %v468 = vcvt.s32.f32 %v452
    %v469 = vcvt.s32.f32 %v453
    %v470 = vcvt.s32.f32 %v454
    %v471 = vcvt.s32.f32 %v455
    %v472 = vcvt.s32.f32 %v456
    %v473 = vcvt.s32.f32 %v457
    %v474 = vcvt.s32.f32 %v458
    %v475 = vcvt.s32.f32 %v459
    %v476 = vcvt.s32.f32 %v460
    %v477 = vcvt.s32.f32 %v461
    %v478 = vpack.c.bf16 %v463, %v462
    %v479 = vpack.c.bf16 %v465, %v464
    %v480 = vpack.c.bf16 %v467, %v466
    %v481 = vpack.c.bf16 %v469, %v468
    %v482 = vpack.c.bf16 %v471, %v470
    %v483 = vpack.c.bf16 %v473, %v472
    %v484 = vpack.c.bf16 %v475, %v474
    %v485 = vpack.c.bf16 %v477, %v476
    %s486 = scalar_lea.vmem [#allocation5], 128
    %v487 = vld [vmem:[%s486] sm:$0xf]
    %v488 = vld [vmem:[%s486 + $0x4] sm:$0xf]
    %v489 = vld [vmem:[%s486 + $0x8] sm:$0xf]
    %v490 = vld [vmem:[%s486 + $0xc] sm:$0xf]
    %v491 = vld [vmem:[%s486 + $0x10] sm:$0xf]
    %v492 = vld [vmem:[%s486 + $0x14] sm:$0xf]
    %v493 = vld [vmem:[%s486 + $0x18] sm:$0xf]
    %v494 = vld [vmem:[%s486 + $0x1c] sm:$0xf]
    %v495 = vld [vmem:[%s486 + $0x20] sm:$0xf]
    %v496 = vld [vmem:[%s486 + $0x24] sm:$0xf]
    %v497 = vld [vmem:[%s486 + $0x28] sm:$0xf]
    %v498 = vld [vmem:[%s486 + $0x2c] sm:$0xf]
    %v499 = vld [vmem:[%s486 + $0x30] sm:$0xf]
    %v500 = vld [vmem:[%s486 + $0x34] sm:$0xf]
    %v501 = vld [vmem:[%s486 + $0x38] sm:$0xf]
    %v502 = vld [vmem:[%s486 + $0x3c] sm:$0xf]
    %503 = vxpose.xlu0.c.b16.start [1/8] %v478, 128
    %504 = vxpose.xlu0.c.b16.cont [2/8] %v479, 128
    %505 = vxpose.xlu0.c.b16.cont [3/8] %v480, 128
    %506 = vxpose.xlu0.c.b16.cont [4/8] %v481, 128
    %507 = vxpose.xlu0.c.b16.cont [5/8] %v482, 128
    %508 = vxpose.xlu0.c.b16.cont [6/8] %v483, 128
    %509 = vxpose.xlu0.c.b16.cont [7/8] %v484, 128
    %510 = vxpose.xlu0.c.b16.end [8/8] %v485, 128
    %v511 = vpop.trf.xlu0
    %v512 = vpop.trf.xlu0
    %v513 = vpop.trf.xlu0
    %v514 = vpop.trf.xlu0
    %v515 = vpop.trf.xlu0
    %v516 = vpop.trf.xlu0
    %v517 = vpop.trf.xlu0
    %v518 = vpop.trf.xlu0
    %v535 = vunpack.c.l.b16 %v487
    %v536 = vunpack.c.l.b16 %v488
    %v537 = vunpack.c.l.b16 %v489
    %v538 = vunpack.c.l.b16 %v490
    %v539 = vunpack.c.l.b16 %v491
    %v540 = vunpack.c.l.b16 %v492
    %v541 = vunpack.c.l.b16 %v493
    %v542 = vunpack.c.l.b16 %v494
    %v543 = vunpack.c.l.b16 %v495
    %v544 = vunpack.c.l.b16 %v496
    %v545 = vunpack.c.l.b16 %v497
    %v546 = vunpack.c.l.b16 %v498
    %v547 = vunpack.c.l.b16 %v499
    %v548 = vunpack.c.l.b16 %v500
    %v549 = vunpack.c.l.b16 %v501
    %v550 = vunpack.c.l.b16 %v502
    %v551 = vpack.c.b16 %v536, %v535
    %v552 = vpack.c.b16 %v538, %v537
    %v553 = vpack.c.b16 %v540, %v539
    %v554 = vpack.c.b16 %v542, %v541
    %v555 = vpack.c.b16 %v544, %v543
    %v556 = vpack.c.b16 %v546, %v545
    %v557 = vpack.c.b16 %v548, %v547
    %v558 = vpack.c.b16 %v550, %v549
    %567 = vmatprep.subr.bf16.mxu0 0
    %568 = vmatpush1.bf16.msra.mxu0 %v551
    %569 = vmatprep.subr.bf16.mxu0 0
    %570 = vmatpush1.bf16.msra.mxu0 %v552
    %571 = vmatprep.subr.bf16.mxu0 0
    %572 = vmatpush1.bf16.msra.mxu0 %v553
    %573 = vmatprep.subr.bf16.mxu0 0
    %574 = vmatpush1.bf16.msra.mxu0 %v554
    %575 = vmatprep.subr.bf16.mxu0 0
    %576 = vmatpush1.bf16.msra.mxu0 %v555
    %577 = vmatprep.subr.bf16.mxu0 0
    %578 = vmatpush1.bf16.msra.mxu0 %v556
    %579 = vmatprep.subr.bf16.mxu0 0
    %580 = vmatpush1.bf16.msra.mxu0 %v557
    %581 = vmatprep.subr.bf16.mxu0 0
    %582 = vmatpush1.bf16.msra.mxu0 %v558
    %583 = vmatprep.subr.bf16.mxu0 0
    %584 = vmatpush1.bf16.msra.mxu0 0
    %585 = vmatprep.subr.bf16.mxu0 0
    %586 = vmatpush1.bf16.msra.mxu0 0
    %587 = vmatprep.subr.bf16.mxu0 0
    %588 = vmatpush1.bf16.msra.mxu0 0
    %589 = vmatprep.subr.bf16.mxu0 0
    %590 = vmatpush1.bf16.msra.mxu0 0
    %591 = vmatprep.subr.bf16.mxu0 0
    %592 = vmatpush1.bf16.msra.mxu0 0
    %593 = vmatprep.subr.bf16.mxu0 0
    %594 = vmatpush1.bf16.msra.mxu0 0
    %595 = vmatprep.subr.bf16.mxu0 0
    %596 = vmatpush1.bf16.msra.mxu0 0
    %597 = vmatprep.subr.bf16.mxu0 0
    %598 = vmatpush1.bf16.msra.mxu0 0
    %599 = vmatprep.mubr.bf16.mxu0 0
    %600 = vmatmul.mubr.bf16.gmra.mrb[0].mxu0 %v511
    %v601 = vpop.f32.mrb[0].mxu0
    %v602 = vadd.f32 0.0, %v601
    %v603 = vpop.f32.mrb[0].mxu0
    %v604 = vpop.f32.mrb[0].mxu0
    %v605 = vadd.f32 0.0, %v604
    %v606 = vpop.f32.mrb[0].mxu0
    %607 = vdwg.mxu0
    %608 = vst [vmem:[#allocation7 + $0x10] sm:$0xff] %v602
    %609 = vst [vmem:[#allocation7 + $0x28] sm:$0xff] %v605
    // Predicated region
    $region18: #{tpu_custom_call.1} parent=1 // pred_check
      _
    $region19: #{tpu_custom_call.1} parent=1 // pred_check_branch
      %611 = sbr.rel (0) target = $region21
    $region20: #{tpu_custom_call.1} parent=1 // pred_region
      %s613 = ssub.s32 768, 768
      %614 = vsyncadd [#allocation4], %s613
      %s615 = sshll.u32 [#allocation7], 4
      %s616 = int_to_ptr.vmem [resolvable:$true] %s615
      %621 = dma.vmem_to_hbm [thread:$0]  %s616, 768, %s2, [#allocation4], 384, 384, 24
    $region21: #{tpu_custom_call.1} parent=1 // pred_fallthru
      _
    // Predicated region
    $region22: #{tpu_custom_call.1} parent=1 // pred_check
      _
    $region23: #{tpu_custom_call.1} parent=1 // pred_check_branch
      %623 = sbr.rel (0) target = $region25
    $region24: #{tpu_custom_call.1} parent=1 // pred_region
      %624 = dma.done [#allocation4], 768
    $region25: #{tpu_custom_call.1} parent=1 // pred_fallthru
      _
    %625 = vsyncpa [#allocation3], 1
    %626 = vsyncpa [#allocation6], 1
    %627 = vsyncpa [#allocation4], 1

</llo_original>
